<compile_context>
chip_gen: v7x
topology: tpu7x:2x2x1
jax: 0.10.0
libtpu: 0.0.40
codegen_flags: <defaults>
</compile_context>

<pallas_src>
import functools

import jax
import jax.numpy as jnp
from jax.experimental import pallas as pl
from jax.experimental.pallas import tpu as pltpu


def _round_up(n, m):
    return (n + m - 1) // m * m


def fc_encoder_kernel(x_ref, w1_ref, b1_ref, w2_ref, b2_ref, out_ref):
    # Cast x to the matmul compute dtype in-kernel (saves a wrapper HBM pass).
    x = x_ref[...].astype(w1_ref.dtype)                       # (tb, I)
    # Layer 1: Linear(input -> hidden) + ReLU, f32 accumulation.
    h1 = jnp.dot(x, w1_ref[...], preferred_element_type=jnp.float32)
    h1 = jnp.maximum(h1 + b1_ref[...], 0.0)                   # (tb, H) + (1, H)
    # Layer 2: Linear(hidden -> embedding) + ReLU.
    h2 = jnp.dot(h1.astype(w2_ref.dtype), w2_ref[...],
                 preferred_element_type=jnp.float32)
    h2 = jnp.maximum(h2 + b2_ref[...], 0.0)                   # (tb, E) + (1, E)
    out_ref[...] = h2.astype(out_ref.dtype)


@functools.partial(jax.jit, static_argnames=("block_b", "use_bf16"))
def fc_encoder(x, w1, b1, w2, b2, *, block_b=4096, use_bf16=True):
    """FC_Encoder forward.

    x:  (B, input_size) f32
    w1: (hidden, input_size), b1: (hidden,)       -- PyTorch nn.Linear layout
    w2: (embedding, hidden),  b2: (embedding,)
    Returns (B, embedding) in x.dtype.
    """
    B, I = x.shape
    H = w1.shape[0]
    E = w2.shape[0]

    compute_dtype = jnp.bfloat16 if use_bf16 else jnp.float32

    # Pre-transpose weights to (in, out); tiny one-time cost, stays resident.
    w1_t = w1.T.astype(compute_dtype)                 # (I, H)
    w2_t = w2.T.astype(compute_dtype)                 # (H, E)
    b1_2d = b1.reshape(1, H).astype(jnp.float32)
    b2_2d = b2.reshape(1, E).astype(jnp.float32)

    # Batch tile: multiple of 8 sublanes, capped at ceil(B/2) so the grid has
    # at least 2 steps (lets the "parallel" axis shard across v7x's 2 TCs),
    # capped above by block_b.  No batch padding: the last block is partial
    # and Pallas masks its out-of-bounds rows.
    tb = min(block_b, _round_up(max(-(-B // 2), 1), 8))
    tb = max(tb, 8)
    grid = (pl.cdiv(B, tb),)

    # VMEM budget: double-buffered x tile tb*I*4B and out tile tb*E*4B; at the
    # default tb=4096, I=64, E=16 that is ~2.5 MiB total -- well under even
    # v5e's 16 MiB scoped default, so no vmem_limit_bytes override is needed.
    out = pl.pallas_call(
        fc_encoder_kernel,
        out_shape=jax.ShapeDtypeStruct((B, E), x.dtype),
        grid=grid,
        in_specs=[
            pl.BlockSpec((tb, I), lambda i: (i, 0)),   # x: marches over batch
            pl.BlockSpec((I, H), lambda i: (0, 0)),    # W1^T: resident
            pl.BlockSpec((1, H), lambda i: (0, 0)),    # b1: resident
            pl.BlockSpec((H, E), lambda i: (0, 0)),    # W2^T: resident
            pl.BlockSpec((1, E), lambda i: (0, 0)),    # b2: resident
        ],
        out_specs=pl.BlockSpec((tb, E), lambda i: (i, 0)),
        compiler_params=pltpu.CompilerParams(
            dimension_semantics=("parallel",)),        # pays only on v7x (2 TCs)
    )(x, w1_t, b1_2d, w2_t, b2_2d)

    return out


def init_linear_params(key, in_features, out_features):
    """Deterministic init matching nn.Linear's U(-1/sqrt(fan_in), 1/sqrt(fan_in))."""
    k_w, k_b = jax.random.split(key)
    bound = 1.0 / jnp.sqrt(jnp.float32(in_features))
    w = jax.random.uniform(k_w, (out_features, in_features), jnp.float32,
                           minval=-bound, maxval=bound)
    b = jax.random.uniform(k_b, (out_features,), jnp.float32,
                           minval=-bound, maxval=bound)
    return w, b


if __name__ == "__main__":
    # Shapes implied by the module: Linear(input_size, hidden), Linear(hidden, embedding).
    # Batch chosen so the grid has 2 steps with a ragged (masked) last block.
    batch = 200
    input_size = 64
    hidden_size = 32
    embedding_size = 16

    key = jax.random.PRNGKey(0)
    k_x, k_fc1, k_fc2 = jax.random.split(key, 3)

    x = jax.random.normal(k_x, (batch, input_size), jnp.float32)
    w1, b1 = init_linear_params(k_fc1, input_size, hidden_size)      # (H, I), (H,)
    w2, b2 = init_linear_params(k_fc2, hidden_size, embedding_size)  # (E, H), (E,)

    out = fc_encoder(x, w1, b1, w2, b2)
    out = jax.block_until_ready(out)

    # Reference check in plain JAX (same semantics as the PyTorch forward).
    # Tolerance relaxed because matmul operands are rounded to bf16
    # (accumulation stays f32).  Use use_bf16=False for strict f32 parity.
    ref = jnp.maximum(x @ w1.T + b1, 0.0)
    ref = jnp.maximum(ref @ w2.T + b2, 0.0)
    assert out.shape == (batch, embedding_size)
    assert jnp.allclose(out, ref, atol=2e-2, rtol=2e-2), \
        f"max abs err {jnp.max(jnp.abs(out - ref))}"

    print("KERNEL_OK")
</pallas_src>

<mosaic_0001>
module attributes {stable_mosaic.version = 11 : i64} {
  func.func @fc_encoder_kernel(%arg0: i32, %arg1: memref<104x64xf32, #tpu.memory_space<vmem>>, %arg2: memref<64x32xbf16, #tpu.memory_space<vmem>>, %arg3: memref<1x32xf32, #tpu.memory_space<vmem>>, %arg4: memref<32x16xbf16, #tpu.memory_space<vmem>>, %arg5: memref<1x16xf32, #tpu.memory_space<vmem>>, %arg6: memref<104x16xf32, #tpu.memory_space<vmem>>) attributes {dimension_semantics = [#tpu.dimension_semantics<parallel>], iteration_bounds = array<i64: 2>, scalar_prefetch = 0 : i64, scratch_operands = 0 : i64, tpu.core_type = #tpu.core_type<tc>, window_params = [{transform_indices = @transform_0, window_bounds = array<i64: 104, 64>}, {pipeline_mode = #tpu.pipeline_mode<synchronous>, transform_indices = @transform_1, window_bounds = array<i64: 64, 32>}, {pipeline_mode = #tpu.pipeline_mode<synchronous>, transform_indices = @transform_2, window_bounds = array<i64: 1, 32>}, {pipeline_mode = #tpu.pipeline_mode<synchronous>, transform_indices = @transform_3, window_bounds = array<i64: 32, 16>}, {pipeline_mode = #tpu.pipeline_mode<synchronous>, transform_indices = @transform_4, window_bounds = array<i64: 1, 16>}, {transform_indices = @transform_5, window_bounds = array<i64: 104, 16>}]} {
    %c0 = arith.constant 0 : index
    %c0_0 = arith.constant 0 : index
    %0 = vector.load %arg1[%c0, %c0_0] : memref<104x64xf32, #tpu.memory_space<vmem>>, vector<104x64xf32>
    %1 = arith.truncf %0 : vector<104x64xf32> to vector<104x64xbf16>
    %c0_1 = arith.constant 0 : index
    %c0_2 = arith.constant 0 : index
    %2 = vector.load %arg2[%c0_1, %c0_2] : memref<64x32xbf16, #tpu.memory_space<vmem>>, vector<64x32xbf16>
    %cst = arith.constant dense<0.000000e+00> : vector<104x32xf32>
    %3 = tpu.matmul %1, %2, %cst {dimension_numbers = #tpu.dot_dimension_numbers<[1], [0], [0], [1], [0, 0, 1, 1], [], []>} : vector<104x64xbf16>, vector<64x32xbf16>, vector<104x32xf32> -> vector<104x32xf32>
    %c0_3 = arith.constant 0 : index
    %c0_4 = arith.constant 0 : index
    %4 = vector.load %arg3[%c0_3, %c0_4] : memref<1x32xf32, #tpu.memory_space<vmem>>, vector<1x32xf32>
    %5 = vector.broadcast %4 : vector<1x32xf32> to vector<104x32xf32>
    %6 = arith.addf %3, %5 : vector<104x32xf32>
    %cst_5 = arith.constant 0.000000e+00 : f32
    %7 = vector.broadcast %cst_5 : f32 to vector<104x32xf32>
    %8 = arith.maximumf %6, %7 : vector<104x32xf32>
    %9 = arith.truncf %8 : vector<104x32xf32> to vector<104x32xbf16>
    %c0_6 = arith.constant 0 : index
    %c0_7 = arith.constant 0 : index
    %10 = vector.load %arg4[%c0_6, %c0_7] : memref<32x16xbf16, #tpu.memory_space<vmem>>, vector<32x16xbf16>
    %cst_8 = arith.constant dense<0.000000e+00> : vector<104x16xf32>
    %11 = tpu.matmul %9, %10, %cst_8 {dimension_numbers = #tpu.dot_dimension_numbers<[1], [0], [0], [1], [0, 0, 1, 1], [], []>} : vector<104x32xbf16>, vector<32x16xbf16>, vector<104x16xf32> -> vector<104x16xf32>
    %c0_9 = arith.constant 0 : index
    %c0_10 = arith.constant 0 : index
    %12 = vector.load %arg5[%c0_9, %c0_10] : memref<1x16xf32, #tpu.memory_space<vmem>>, vector<1x16xf32>
    %13 = vector.broadcast %12 : vector<1x16xf32> to vector<104x16xf32>
    %14 = arith.addf %11, %13 : vector<104x16xf32>
    %cst_11 = arith.constant 0.000000e+00 : f32
    %15 = vector.broadcast %cst_11 : f32 to vector<104x16xf32>
    %16 = arith.maximumf %14, %15 : vector<104x16xf32>
    %c0_12 = arith.constant 0 : index
    %c0_13 = arith.constant 0 : index
    %17 = vector.load %arg6[%c0_12, %c0_13] : memref<104x16xf32, #tpu.memory_space<vmem>>, vector<104x16xf32>
    tpu.vector_store %arg6[%c0_12, %c0_13], %16 {strides = array<i32>} : memref<104x16xf32, #tpu.memory_space<vmem>>, vector<104x16xf32>,
    return
  }
  func.func @transform_0(%arg0: i32) -> (i32, i32) {
    %c0_i32 = arith.constant 0 : i32
    %c0_i32_0 = arith.constant 0 : i32
    return %arg0, %c0_i32 : i32, i32
  }
  func.func @transform_1(%arg0: i32) -> (i32, i32) {
    %c0_i32 = arith.constant 0 : i32
    %c0_i32_0 = arith.constant 0 : i32
    %c0_i32_1 = arith.constant 0 : i32
    return %c0_i32, %c0_i32_0 : i32, i32
  }
  func.func @transform_2(%arg0: i32) -> (i32, i32) {
    %c0_i32 = arith.constant 0 : i32
    %c0_i32_0 = arith.constant 0 : i32
    %c0_i32_1 = arith.constant 0 : i32
    return %c0_i32, %c0_i32_0 : i32, i32
  }
  func.func @transform_3(%arg0: i32) -> (i32, i32) {
    %c0_i32 = arith.constant 0 : i32
    %c0_i32_0 = arith.constant 0 : i32
    %c0_i32_1 = arith.constant 0 : i32
    return %c0_i32, %c0_i32_0 : i32, i32
  }
  func.func @transform_4(%arg0: i32) -> (i32, i32) {
    %c0_i32 = arith.constant 0 : i32
    %c0_i32_0 = arith.constant 0 : i32
    %c0_i32_1 = arith.constant 0 : i32
    return %c0_i32, %c0_i32_0 : i32, i32
  }
  func.func @transform_5(%arg0: i32) -> (i32, i32) {
    %c0_i32 = arith.constant 0 : i32
    %c0_i32_0 = arith.constant 0 : i32
    return %arg0, %c0_i32 : i32, i32
  }
}

</mosaic_0001>

<llo_original>
// kernel: fc_encoder.1
$region0: #{fc_encoder.1}
  #allocation0 [shape = 'u32[]', space=smem, size = 0x4, offset = 0x4, fixed_abs, tag = 'smem constant byte address 0x4 - core index']
  #allocation1 [shape = 'u32[144,128]{1,0:T(1,128)}', space=vmem, size = 0x12000, scoped, tag = 'internal scratch']
  %s0 = inlined_call_operand.vmem [shape: f32[200,64], index: 0, kind: input, shape index: {}]
  %s1 = inlined_call_operand.vmem [shape: bf16[64,32], index: 1, kind: input, shape index: {}]
  %s2 = inlined_call_operand.vmem [shape: f32[1,32], index: 2, kind: input, shape index: {}]
  %s3 = inlined_call_operand.vmem [shape: bf16[32,16], index: 3, kind: input, shape index: {}]
  %s4 = inlined_call_operand.vmem [shape: f32[1,16], index: 4, kind: input, shape index: {}]
  %s5 = inlined_call_operand.vmem [shape: f32[200,16], index: 5, kind: output, shape index: {}]
  %s6 = sld [smem:[#allocation0]]
  $region101: #{fc_encoder.1} parent=0
    _
  %s8 = ssub.s32 1, %s6
  %s9 = scalar_select 0, %s8, %s6
  $region1: #{fc_encoder.1} parent=0
    #allocation2 [shape = 'u8[106496]{0}', space=vmem, size = 0x1a000, scoped, tag = 'output window, operand 0']
    loop: start=0, step=1, limit=4
    $region2: #{fc_encoder.1} parent=1 // loop_pre_header
      _
    $region3: #{fc_encoder.1} parent=1 // loop_header
      %s11 = sphi 0, %s15
      %p12 = scmp.ge.s32.totalorder %s11, 4
      %s21 = sphi 0, %s23
      %s24 = sphi 0, %s21
      %s25 = sphi 0, %s24
      %s41 = sphi 0, %s25
      %s45 = sphi 0, %s45
      %s47 = sphi 0, %s45
      %s48 = sphi 0, %s47
      %s62 = sphi 0, %s48
      %s66 = sphi 0, %s66
      %s68 = sphi 0, %s66
      %s69 = sphi 0, %s68
      %s83 = sphi 0, %s69
      %s87 = sphi 0, %s87
      %s89 = sphi 0, %s87
      %s90 = sphi 0, %s89
      %s104 = sphi 0, %s90
      %s108 = sphi 0, %s108
      %s110 = sphi 0, %s108
      %s111 = sphi 0, %s110
      %s125 = sphi 0, %s111
      %s131 = sphi 0, %s133
      %s134 = sphi 0, %s131
      %s135 = sphi 0, %s134
      %s151 = sphi 0, %s135
    $region4: #{fc_encoder.1} parent=1 // loop_header_branch
      %14 = sbr.rel (%p12) target = $region8
    $region5: #{fc_encoder.1} parent=1 // loop_body
      %s16 = ssub.s32 %s11, 1
      %s17 = ssub.s32 %s11, 2
      %s18 = sadd.s32 %s11, 1
      %s19 = ssub.s32 %s11, %s18
      %p20 = scmp.eq.s32.totalorder %s19, 0
      %s22 = sadd.s32 %s21, 1
      %s23 = scalar_select %p20, %s21, %s22
      %p26 = pneg %p20
      %p27 = scmp.eq.s32.totalorder %s11, 1
      %p28 = por %p26, %p27
      %p29 = scmp.ne.s32.totalorder %s21, %s24
      %p30 = scmp.eq.s32.totalorder %s11, 0
      %p31 = por %p29, %p30
      %p32 = scmp.ne.s32.totalorder %s21, %s24
      %p33 = scmp.eq.s32.totalorder %s16, 1
      %p34 = por %p32, %p33
      %p35 = scmp.ne.s32.totalorder %s24, %s25
      %p36 = scmp.eq.s32.totalorder %s16, 0
      %p37 = por %p35, %p36
      %p38 = scmp.ne.s32.totalorder %s24, %s25
      %p39 = scmp.eq.s32.totalorder %s17, 1
      %p40 = por %p38, %p39
      %p42 = scmp.ne.s32.totalorder %s25, %s41
      %p43 = scmp.eq.s32.totalorder %s17, 0
      %p44 = por %p42, %p43
      %s46 = sadd.s32 %s45, 1
      %p49 = scmp.eq.s32.totalorder %s11, 1
      %p50 = scmp.ne.s32.totalorder %s45, %s47
      %p51 = scmp.eq.s32.totalorder %s11, 0
      %p52 = por %p50, %p51
      %p53 = scmp.ne.s32.totalorder %s45, %s47
      %p54 = scmp.eq.s32.totalorder %s16, 1
      %p55 = por %p53, %p54
      %p56 = scmp.ne.s32.totalorder %s47, %s48
      %p57 = scmp.eq.s32.totalorder %s16, 0
      %p58 = por %p56, %p57
      %p59 = scmp.ne.s32.totalorder %s47, %s48
      %p60 = scmp.eq.s32.totalorder %s17, 1
      %p61 = por %p59, %p60
      %p63 = scmp.ne.s32.totalorder %s48, %s62
      %p64 = scmp.eq.s32.totalorder %s17, 0
      %p65 = por %p63, %p64
      %s67 = sadd.s32 %s66, 1
      %p70 = scmp.eq.s32.totalorder %s11, 1
      %p71 = scmp.ne.s32.totalorder %s66, %s68
      %p72 = scmp.eq.s32.totalorder %s11, 0
      %p73 = por %p71, %p72
      %p74 = scmp.ne.s32.totalorder %s66, %s68
      %p75 = scmp.eq.s32.totalorder %s16, 1
      %p76 = por %p74, %p75
      %p77 = scmp.ne.s32.totalorder %s68, %s69
      %p78 = scmp.eq.s32.totalorder %s16, 0
      %p79 = por %p77, %p78
      %p80 = scmp.ne.s32.totalorder %s68, %s69
      %p81 = scmp.eq.s32.totalorder %s17, 1
      %p82 = por %p80, %p81
      %p84 = scmp.ne.s32.totalorder %s69, %s83
      %p85 = scmp.eq.s32.totalorder %s17, 0
      %p86 = por %p84, %p85
      %s88 = sadd.s32 %s87, 1
      %p91 = scmp.eq.s32.totalorder %s11, 1
      %p92 = scmp.ne.s32.totalorder %s87, %s89
      %p93 = scmp.eq.s32.totalorder %s11, 0
      %p94 = por %p92, %p93
      %p95 = scmp.ne.s32.totalorder %s87, %s89
      %p96 = scmp.eq.s32.totalorder %s16, 1
      %p97 = por %p95, %p96
      %p98 = scmp.ne.s32.totalorder %s89, %s90
      %p99 = scmp.eq.s32.totalorder %s16, 0
      %p100 = por %p98, %p99
      %p101 = scmp.ne.s32.totalorder %s89, %s90
      %p102 = scmp.eq.s32.totalorder %s17, 1
      %p103 = por %p101, %p102
      %p105 = scmp.ne.s32.totalorder %s90, %s104
      %p106 = scmp.eq.s32.totalorder %s17, 0
      %p107 = por %p105, %p106
      %s109 = sadd.s32 %s108, 1
      %p112 = scmp.eq.s32.totalorder %s11, 1
      %p113 = scmp.ne.s32.totalorder %s108, %s110
      %p114 = scmp.eq.s32.totalorder %s11, 0
      %p115 = por %p113, %p114
      %p116 = scmp.ne.s32.totalorder %s108, %s110
      %p117 = scmp.eq.s32.totalorder %s16, 1
      %p118 = por %p116, %p117
      %p119 = scmp.ne.s32.totalorder %s110, %s111
      %p120 = scmp.eq.s32.totalorder %s16, 0
      %p121 = por %p119, %p120
      %p122 = scmp.ne.s32.totalorder %s110, %s111
      %p123 = scmp.eq.s32.totalorder %s17, 1
      %p124 = por %p122, %p123
      %p126 = scmp.ne.s32.totalorder %s111, %s125
      %p127 = scmp.eq.s32.totalorder %s17, 0
      %p128 = por %p126, %p127
      %s129 = ssub.s32 %s11, %s18
      %p130 = scmp.eq.s32.totalorder %s129, 0
      %s132 = sadd.s32 %s131, 1
      %s133 = scalar_select %p130, %s131, %s132
      %p136 = pneg %p130
      %p137 = scmp.eq.s32.totalorder %s11, 1
      %p138 = por %p136, %p137
      %p139 = scmp.ne.s32.totalorder %s131, %s134
      %p140 = scmp.eq.s32.totalorder %s11, 0
      %p141 = por %p139, %p140
      %p142 = scmp.ne.s32.totalorder %s131, %s134
      %p143 = scmp.eq.s32.totalorder %s16, 1
      %p144 = por %p142, %p143
      %p145 = scmp.ne.s32.totalorder %s134, %s135
      %p146 = scmp.eq.s32.totalorder %s16, 0
      %p147 = por %p145, %p146
      %p148 = scmp.ne.s32.totalorder %s134, %s135
      %p149 = scmp.eq.s32.totalorder %s17, 1
      %p150 = por %p148, %p149
      %p152 = scmp.ne.s32.totalorder %s135, %s151
      %p153 = scmp.eq.s32.totalorder %s17, 0
      %p154 = por %p152, %p153
      %p155 = scmp.le.s32.totalorder 1, %s11
      %p156 = scmp.lt.s32.totalorder %s11, 3
      %p157 = pnand %p155, %p156
      %p158 = pneg %p157
      // Predicated region
      $region9: #{fc_encoder.1} parent=5 // pred_check
        _
      $region10: #{fc_encoder.1} parent=5 // pred_check_branch
        %160 = sbr.rel (%p157) target = $region12
      $region11: #{fc_encoder.1} parent=5 // pred_region
        %s161 = ssub.s32 %s11, 1
        // Predicated region
        $region13: #{fc_encoder.1} parent=11 // pred_check
          %p162 = pneg %p58
        $region14: #{fc_encoder.1} parent=11 // pred_check_branch
          %164 = sbr.rel (%p162) target = $region16
        $region15: #{fc_encoder.1} parent=11 // pred_region
          _
        $region16: #{fc_encoder.1} parent=11 // pred_fallthru
          _
        // Predicated region
        $region17: #{fc_encoder.1} parent=11 // pred_check
          %p165 = pneg %p79
        $region18: #{fc_encoder.1} parent=11 // pred_check_branch
          %167 = sbr.rel (%p165) target = $region20
        $region19: #{fc_encoder.1} parent=11 // pred_region
          _
        $region20: #{fc_encoder.1} parent=11 // pred_fallthru
          _
        // Predicated region
        $region21: #{fc_encoder.1} parent=11 // pred_check
          %p168 = pneg %p100
        $region22: #{fc_encoder.1} parent=11 // pred_check_branch
          %170 = sbr.rel (%p168) target = $region24
        $region23: #{fc_encoder.1} parent=11 // pred_region
          _
        $region24: #{fc_encoder.1} parent=11 // pred_fallthru
          _
        // Predicated region
        $region25: #{fc_encoder.1} parent=11 // pred_check
          %p171 = pneg %p121
        $region26: #{fc_encoder.1} parent=11 // pred_check_branch
          %173 = sbr.rel (%p171) target = $region28
        $region27: #{fc_encoder.1} parent=11 // pred_region
          _
        $region28: #{fc_encoder.1} parent=11 // pred_fallthru
          _
      $region12: #{fc_encoder.1} parent=5 // pred_fallthru
        _
      %p174 = scmp.lt.s32.totalorder %s11, 2
      // Predicated region
      $region29: #{fc_encoder.1} parent=5 // pred_check
        %p175 = pneg %p174
      $region30: #{fc_encoder.1} parent=5 // pred_check_branch
        %177 = sbr.rel (%p175) target = $region32
      $region31: #{fc_encoder.1} parent=5 // pred_region
        // Predicated region
        $region33: #{fc_encoder.1} parent=31 // pred_check
          %p178 = pneg %p31
        $region34: #{fc_encoder.1} parent=31 // pred_check_branch
          %180 = sbr.rel (%p178) target = $region36
        $region35: #{fc_encoder.1} parent=31 // pred_region
          %s181 = smul.u32 13, %s11
          %s182 = ssub.s32 25, %s181
          %p183 = scmp.lt.s32.totalorder %s182, 13
          %s184 = scalar_select %p183, %s182, 13
          %s185 = smul.u32 128, %s184
          %p186 = scmp.lt.s32.totalorder %s181, 24
          %s187 = scalar_select %p186, %s181, 24
          %s188 = smul.addr %s187, 8
          %s189 = scalar_lea.vmem %s0, %s188
          %s190 = smul.u32 13, %s11
          %s191 = ssub.s32 25, %s190
          %p192 = scmp.lt.s32.totalorder %s191, 13
          %s193 = scalar_select %p192, %s191, 13
          %s194 = smul.u32 128, %s193
        $region36: #{fc_encoder.1} parent=31 // pred_fallthru
          _
      $region32: #{fc_encoder.1} parent=5 // pred_fallthru
        _
      %p195 = scmp.le.s32.totalorder 1, %s11
      %p196 = scmp.lt.s32.totalorder %s11, 3
      %p197 = pnand %p195, %p196
      %p198 = pneg %p197
      // Predicated region
      $region37: #{fc_encoder.1} parent=5 // pred_check
        _
      $region38: #{fc_encoder.1} parent=5 // pred_check_branch
        %200 = sbr.rel (%p197) target = $region40
      $region39: #{fc_encoder.1} parent=5 // pred_region
        %s201 = ssub.s32 %s11, 1
        %s202 = smul.u32 13, %s16
        %s203 = ssub.s32 25, %s202
        %p204 = scmp.lt.s32.totalorder %s203, 13
        %s205 = scalar_select %p204, %s203, 13
        %s206 = smul.u32 128, %s205
        %p207 = scmp.lt.s32.totalorder %s202, 24
        %s208 = scalar_select %p207, %s202, 24
        %s209 = smul.addr %s208, 8
        %s210 = scalar_lea.vmem %s0, %s209
        %p211 = pneg %p37
        %p212 = pneg %p34
        %p213 = pneg %p58
        %p214 = pneg %p55
        %p215 = pneg %p79
        %p216 = pneg %p76
        %p217 = pneg %p100
        %p218 = pneg %p97
        %p219 = pneg %p121
        %p220 = pneg %p118
        %p221 = pneg %p147
        %p222 = pneg %p144
        %s223 = sand.u32 %s134, 1
        %s224 = sand.u32 %s134, 1
        %s225 = smul.addr %s224, 104
        %s226 = scalar_lea.vmem [#allocation2], %s225
        %s227 = smul.u32 13, %s16
        %s228 = ssub.s32 25, %s227
        %p229 = scmp.lt.s32.totalorder %s228, 13
        %s230 = scalar_select %p229, %s228, 13
        %s231 = smul.u32 128, %s230
        %p232 = scmp.lt.s32.totalorder %s227, 24
        %s233 = scalar_select %p232, %s227, 24
        %s234 = smul.addr %s233, 8
        %s235 = scalar_lea.vmem %s0, %s234
        %s236 = smul.u32 13, %s16
        %s237 = ssub.s32 25, %s236
        %p238 = scmp.lt.s32.totalorder %s237, 13
        %s239 = scalar_select %p238, %s237, 13
        %s240 = smul.u32 128, %s239
        %s241 = smul.u32 13, %s16
        %s242 = ssub.s32 25, %s241
        %p243 = scmp.lt.s32.totalorder %s242, 13
        %s244 = scalar_select %p243, %s242, 13
        %s245 = smul.u32 128, %s244
        %v247 = vld [vmem:[%s235] sm:$0xff]
        %v248 = vld [vmem:[%s235 + $0x8] sm:$0xff]
        %v249 = vld [vmem:[%s235 + $0x10] sm:$0xff]
        %v250 = vld [vmem:[%s235 + $0x18] sm:$0xff]
        %v251 = vld [vmem:[%s235 + $0x20] sm:$0xff]
        %v252 = vld [vmem:[%s235 + $0x28] sm:$0xff]
        %v253 = vld [vmem:[%s235 + $0x30] sm:$0xff]
        %v254 = vld [vmem:[%s235 + $0x38] sm:$0xff]
        %v255 = vld [vmem:[%s235 + $0x40] sm:$0xff]
        %v256 = vld [vmem:[%s235 + $0x48] sm:$0xff]
        %v257 = vld [vmem:[%s235 + $0x50] sm:$0xff]
        %v258 = vld [vmem:[%s235 + $0x58] sm:$0xff]
        %v259 = vld [vmem:[%s235 + $0x60] sm:$0xff]
        %v260 = vpack.c.bf16 %v248, %v247
        %v261 = vpack.c.bf16 %v250, %v249
        %v262 = vpack.c.bf16 %v252, %v251
        %v263 = vpack.c.bf16 %v254, %v253
        %v264 = vpack.c.bf16 %v256, %v255
        %v265 = vpack.c.bf16 %v258, %v257
        %v266 = vpack.c.bf16 %v259, %v259
        %v267 = vld [vmem:[%s1] sm:$0xf]
        %v268 = vld [vmem:[%s1 + $0x4] sm:$0xf]
        %v269 = vld [vmem:[%s1 + $0x8] sm:$0xf]
        %v270 = vld [vmem:[%s1 + $0xc] sm:$0xf]
        %v271 = vld [vmem:[%s1 + $0x10] sm:$0xf]
        %v272 = vld [vmem:[%s1 + $0x14] sm:$0xf]
        %v273 = vld [vmem:[%s1 + $0x18] sm:$0xf]
        %v274 = vld [vmem:[%s1 + $0x1c] sm:$0xf]
        %v275 = vld [vmem:[%s2] sm:$0x1]
        %v277 = vlaneseq
        %v278 = vshrl.u32 %v277, 7
        %v279 = vsub.s32 0, %v278
        %v280 = vrot.slane %v275, %v279
        %v290 = vunpack.c.l.b16 %v267
        %v291 = vunpack.c.l.b16 %v268
        %v292 = vunpack.c.l.b16 %v269
        %v293 = vunpack.c.l.b16 %v270
        %v294 = vunpack.c.l.b16 %v271
        %v295 = vunpack.c.l.b16 %v272
        %v296 = vunpack.c.l.b16 %v273
        %v297 = vunpack.c.l.b16 %v274
        %v298 = vpack.c.b16 %v291, %v290
        %v299 = vpack.c.b16 %v293, %v292
        %v300 = vpack.c.b16 %v295, %v294
        %v301 = vpack.c.b16 %v297, %v296
        %vm306 = vcmask 523264
        %v308 = vsel %vm306, %v260, 0
        %v311 = vsel %vm306, %v261, 0
        %v314 = vsel %vm306, %v262, 0
        %v317 = vsel %vm306, %v263, 0
        %v320 = vsel %vm306, %v264, 0
        %v323 = vsel %vm306, %v265, 0
        %v326 = vsel %vm306, %v266, 0
        %328 = vmatprep.subr.bf16.mxu0 0
        %329 = vmatpush1.bf16.msra.mxu0 %v298
        %330 = vmatprep.subr.bf16.mxu0 0
        %331 = vmatpush1.bf16.msra.mxu0 %v299
        %332 = vmatprep.subr.bf16.mxu0 0
        %333 = vmatpush1.bf16.msra.mxu0 %v300
        %334 = vmatprep.subr.bf16.mxu0 0
        %335 = vmatpush1.bf16.msra.mxu0 %v301
        %336 = vmatprep.subr.bf16.mxu0 0
        %337 = vmatpush1.bf16.msra.mxu0 0
        %338 = vmatprep.subr.bf16.mxu0 0
        %339 = vmatpush1.bf16.msra.mxu0 0
        %340 = vmatprep.subr.bf16.mxu0 0
        %341 = vmatpush1.bf16.msra.mxu0 0
        %342 = vmatprep.subr.bf16.mxu0 0
        %343 = vmatpush1.bf16.msra.mxu0 0
        %344 = vmatprep.subr.bf16.mxu0 0
        %345 = vmatpush1.bf16.msra.mxu0 0
        %346 = vmatprep.subr.bf16.mxu0 0
        %347 = vmatpush1.bf16.msra.mxu0 0
        %348 = vmatprep.subr.bf16.mxu0 0
        %349 = vmatpush1.bf16.msra.mxu0 0
        %350 = vmatprep.subr.bf16.mxu0 0
        %351 = vmatpush1.bf16.msra.mxu0 0
        %352 = vmatprep.subr.bf16.mxu0 0
        %353 = vmatpush1.bf16.msra.mxu0 0
        %354 = vmatprep.subr.bf16.mxu0 0
        %355 = vmatpush1.bf16.msra.mxu0 0
        %356 = vmatprep.subr.bf16.mxu0 0
        %357 = vmatpush1.bf16.msra.mxu0 0
        %358 = vmatprep.subr.bf16.mxu0 0
        %359 = vmatpush1.bf16.msra.mxu0 0
        %360 = vmatprep.mubr.bf16.mxu0 0
        %361 = vmatmul.mubr.bf16.gmra.mrb[0].mxu0 %v308
        %v362 = vpop.f32.mrb[0].mxu0
        %v363 = vadd.f32 %v280, %v362
        %v364 = vpop.f32.mrb[0].mxu0
        %v365 = vpop.f32.mrb[0].mxu0
        %v366 = vadd.f32 %v280, %v365
        %v367 = vpop.f32.mrb[0].mxu0
        %368 = vmatprep.mubr.bf16.mxu0 0
        %369 = vmatmul.mubr.bf16.gmra.mrb[0].mxu0 %v311
        %v370 = vpop.f32.mrb[0].mxu0
        %v371 = vadd.f32 %v280, %v370
        %v372 = vpop.f32.mrb[0].mxu0
        %v373 = vpop.f32.mrb[0].mxu0
        %v374 = vadd.f32 %v280, %v373
        %v375 = vpop.f32.mrb[0].mxu0
        %376 = vmatprep.mubr.bf16.mxu0 0
        %377 = vmatmul.mubr.bf16.gmra.mrb[0].mxu0 %v314
        %v378 = vpop.f32.mrb[0].mxu0
        %v379 = vadd.f32 %v280, %v378
        %v380 = vpop.f32.mrb[0].mxu0
        %v381 = vpop.f32.mrb[0].mxu0
        %v382 = vadd.f32 %v280, %v381
        %v383 = vpop.f32.mrb[0].mxu0
        %384 = vmatprep.mubr.bf16.mxu0 0
        %385 = vmatmul.mubr.bf16.gmra.mrb[0].mxu0 %v317
        %v386 = vpop.f32.mrb[0].mxu0
        %v387 = vadd.f32 %v280, %v386
        %v388 = vpop.f32.mrb[0].mxu0
        %v389 = vpop.f32.mrb[0].mxu0
        %v390 = vadd.f32 %v280, %v389
        %v391 = vpop.f32.mrb[0].mxu0
        %392 = vmatprep.mubr.bf16.mxu0 0
        %393 = vmatmul.mubr.bf16.gmra.mrb[0].mxu0 %v320
        %v394 = vpop.f32.mrb[0].mxu0
        %v395 = vadd.f32 %v280, %v394
        %v396 = vpop.f32.mrb[0].mxu0
        %v397 = vpop.f32.mrb[0].mxu0
        %v398 = vadd.f32 %v280, %v397
        %v399 = vpop.f32.mrb[0].mxu0
        %400 = vmatprep.mubr.bf16.mxu0 0
        %401 = vmatmul.mubr.bf16.gmra.mrb[0].mxu0 %v323
        %v402 = vpop.f32.mrb[0].mxu0
        %v403 = vadd.f32 %v280, %v402
        %v404 = vpop.f32.mrb[0].mxu0
        %v405 = vpop.f32.mrb[0].mxu0
        %v406 = vadd.f32 %v280, %v405
        %v407 = vpop.f32.mrb[0].mxu0
        %408 = vmatprep.mubr.bf16.mxu0 0
        %409 = vmatmul.mubr.bf16.gmra.mrb[0].mxu0 %v326
        %v410 = vpop.f32.mrb[0].mxu0
        %v411 = vadd.f32 %v280, %v410
        %v412 = vpop.f32.mrb[0].mxu0
        %v413 = vpop.f32.mrb[0].mxu0
        %v414 = vpop.f32.mrb[0].mxu0
        %415 = vdwg.mxu0
        %v416 = vmax.f32 %v363, 0.0
        %v417 = vmax.f32 %v366, 0.0
        %v418 = vmax.f32 %v371, 0.0
        %v419 = vmax.f32 %v374, 0.0
        %v420 = vmax.f32 %v379, 0.0
        %v421 = vmax.f32 %v382, 0.0
        %v422 = vmax.f32 %v387, 0.0
        %v423 = vmax.f32 %v390, 0.0
        %v424 = vmax.f32 %v395, 0.0
        %v425 = vmax.f32 %v398, 0.0
        %v426 = vmax.f32 %v403, 0.0
        %v427 = vmax.f32 %v406, 0.0
        %v428 = vmax.f32 %v411, 0.0
        %v429 = vpack.c.bf16 %v417, %v416
        %v430 = vpack.c.bf16 %v419, %v418
        %v431 = vpack.c.bf16 %v421, %v420
        %v432 = vpack.c.bf16 %v423, %v422
        %v433 = vpack.c.bf16 %v425, %v424
        %v434 = vpack.c.bf16 %v427, %v426
        %v435 = vpack.c.bf16 %v428, %v428
        %v436 = vld [vmem:[%s3] sm:$0xf]
        %v437 = vld [vmem:[%s3 + $0x4] sm:$0xf]
        %v438 = vld [vmem:[%s3 + $0x8] sm:$0xf]
        %v439 = vld [vmem:[%s3 + $0xc] sm:$0xf]
        %v440 = vld [vmem:[%s4] sm:$0x1]
        %v442 = vlaneseq
        %v443 = vshrl.u32 %v442, 7
        %v444 = vsub.s32 0, %v443
        %v445 = vrot.slane %v440, %v444
        %v451 = vunpack.c.l.b16 %v436
        %v452 = vunpack.c.l.b16 %v437
        %v453 = vunpack.c.l.b16 %v438
        %v454 = vunpack.c.l.b16 %v439
        %v455 = vpack.c.b16 %v452, %v451
        %v456 = vpack.c.b16 %v454, %v453
        %vm459 = vcmask 261120
        %v461 = vsel %vm459, %v429, 0
        %v464 = vsel %vm459, %v430, 0
        %v467 = vsel %vm459, %v431, 0
        %v470 = vsel %vm459, %v432, 0
        %v473 = vsel %vm459, %v433, 0
        %v476 = vsel %vm459, %v434, 0
        %v479 = vsel %vm459, %v435, 0
        %481 = vmatprep.subr.bf16.mxu0 0
        %482 = vmatpush1.bf16.msra.mxu0 %v455
        %483 = vmatprep.subr.bf16.mxu0 0
        %484 = vmatpush1.bf16.msra.mxu0 %v456
        %485 = vmatprep.subr.bf16.mxu0 0
        %486 = vmatpush1.bf16.msra.mxu0 0
        %487 = vmatprep.subr.bf16.mxu0 0
        %488 = vmatpush1.bf16.msra.mxu0 0
        %489 = vmatprep.subr.bf16.mxu0 0
        %490 = vmatpush1.bf16.msra.mxu0 0
        %491 = vmatprep.subr.bf16.mxu0 0
        %492 = vmatpush1.bf16.msra.mxu0 0
        %493 = vmatprep.subr.bf16.mxu0 0
        %494 = vmatpush1.bf16.msra.mxu0 0
        %495 = vmatprep.subr.bf16.mxu0 0
        %496 = vmatpush1.bf16.msra.mxu0 0
        %497 = vmatprep.subr.bf16.mxu0 0
        %498 = vmatpush1.bf16.msra.mxu0 0
        %499 = vmatprep.subr.bf16.mxu0 0
        %500 = vmatpush1.bf16.msra.mxu0 0
        %501 = vmatprep.subr.bf16.mxu0 0
        %502 = vmatpush1.bf16.msra.mxu0 0
        %503 = vmatprep.subr.bf16.mxu0 0
        %504 = vmatpush1.bf16.msra.mxu0 0
        %505 = vmatprep.subr.bf16.mxu0 0
        %506 = vmatpush1.bf16.msra.mxu0 0
        %507 = vmatprep.subr.bf16.mxu0 0
        %508 = vmatpush1.bf16.msra.mxu0 0
        %509 = vmatprep.subr.bf16.mxu0 0
        %510 = vmatpush1.bf16.msra.mxu0 0
        %511 = vmatprep.subr.bf16.mxu0 0
        %512 = vmatpush1.bf16.msra.mxu0 0
        %513 = vmatprep.mubr.bf16.mxu0 0
        %514 = vmatmul.mubr.bf16.gmra.mrb[0].mxu0 %v461
        %v515 = vpop.f32.mrb[0].mxu0
        %v516 = vadd.f32 %v445, %v515
        %v517 = vpop.f32.mrb[0].mxu0
        %v518 = vpop.f32.mrb[0].mxu0
        %v519 = vadd.f32 %v445, %v518
        %v520 = vpop.f32.mrb[0].mxu0
        %521 = vmatprep.mubr.bf16.mxu0 0
        %522 = vmatmul.mubr.bf16.gmra.mrb[0].mxu0 %v464
        %v523 = vpop.f32.mrb[0].mxu0
        %v524 = vadd.f32 %v445, %v523
        %v525 = vpop.f32.mrb[0].mxu0
        %v526 = vpop.f32.mrb[0].mxu0
        %v527 = vadd.f32 %v445, %v526
        %v528 = vpop.f32.mrb[0].mxu0
        %529 = vmatprep.mubr.bf16.mxu0 0
        %530 = vmatmul.mubr.bf16.gmra.mrb[0].mxu0 %v467
        %v531 = vpop.f32.mrb[0].mxu0
        %v532 = vadd.f32 %v445, %v531
        %v533 = vpop.f32.mrb[0].mxu0
        %v534 = vpop.f32.mrb[0].mxu0
        %v535 = vadd.f32 %v445, %v534
        %v536 = vpop.f32.mrb[0].mxu0
        %537 = vmatprep.mubr.bf16.mxu0 0
        %538 = vmatmul.mubr.bf16.gmra.mrb[0].mxu0 %v470
        %v539 = vpop.f32.mrb[0].mxu0
        %v540 = vadd.f32 %v445, %v539
        %v541 = vpop.f32.mrb[0].mxu0
        %v542 = vpop.f32.mrb[0].mxu0
        %v543 = vadd.f32 %v445, %v542
        %v544 = vpop.f32.mrb[0].mxu0
        %545 = vmatprep.mubr.bf16.mxu0 0
        %546 = vmatmul.mubr.bf16.gmra.mrb[0].mxu0 %v473
        %v547 = vpop.f32.mrb[0].mxu0
        %v548 = vadd.f32 %v445, %v547
        %v549 = vpop.f32.mrb[0].mxu0
        %v550 = vpop.f32.mrb[0].mxu0
        %v551 = vadd.f32 %v445, %v550
        %v552 = vpop.f32.mrb[0].mxu0
        %553 = vmatprep.mubr.bf16.mxu0 0
        %554 = vmatmul.mubr.bf16.gmra.mrb[0].mxu0 %v476
        %v555 = vpop.f32.mrb[0].mxu0
        %v556 = vadd.f32 %v445, %v555
        %v557 = vpop.f32.mrb[0].mxu0
        %v558 = vpop.f32.mrb[0].mxu0
        %v559 = vadd.f32 %v445, %v558
        %v560 = vpop.f32.mrb[0].mxu0
        %561 = vmatprep.mubr.bf16.mxu0 0
        %562 = vmatmul.mubr.bf16.gmra.mrb[0].mxu0 %v479
        %v563 = vpop.f32.mrb[0].mxu0
        %v564 = vadd.f32 %v445, %v563
        %v565 = vpop.f32.mrb[0].mxu0
        %v566 = vpop.f32.mrb[0].mxu0
        %v567 = vpop.f32.mrb[0].mxu0
        %568 = vdwg.mxu0
        %v569 = vmax.f32 %v516, 0.0
        %v570 = vmax.f32 %v519, 0.0
        %v571 = vmax.f32 %v524, 0.0
        %v572 = vmax.f32 %v527, 0.0
        %v573 = vmax.f32 %v532, 0.0
        %v574 = vmax.f32 %v535, 0.0
        %v575 = vmax.f32 %v540, 0.0
        %v576 = vmax.f32 %v543, 0.0
        %v577 = vmax.f32 %v548, 0.0
        %v578 = vmax.f32 %v551, 0.0
        %v579 = vmax.f32 %v556, 0.0
        %v580 = vmax.f32 %v559, 0.0
        %v581 = vmax.f32 %v564, 0.0
        %vm582 = vcmask 130048
        %583 = vst.msk [vmem:[%s226] sm:$0xff] %vm582, %v569
        %584 = vst.msk [vmem:[%s226 + $0x8] sm:$0xff] %vm582, %v570
        %585 = vst.msk [vmem:[%s226 + $0x10] sm:$0xff] %vm582, %v571
        %586 = vst.msk [vmem:[%s226 + $0x18] sm:$0xff] %vm582, %v572
        %587 = vst.msk [vmem:[%s226 + $0x20] sm:$0xff] %vm582, %v573
        %588 = vst.msk [vmem:[%s226 + $0x28] sm:$0xff] %vm582, %v574
        %589 = vst.msk [vmem:[%s226 + $0x30] sm:$0xff] %vm582, %v575
        %590 = vst.msk [vmem:[%s226 + $0x38] sm:$0xff] %vm582, %v576
        %591 = vst.msk [vmem:[%s226 + $0x40] sm:$0xff] %vm582, %v577
        %592 = vst.msk [vmem:[%s226 + $0x48] sm:$0xff] %vm582, %v578
        %593 = vst.msk [vmem:[%s226 + $0x50] sm:$0xff] %vm582, %v579
        %594 = vst.msk [vmem:[%s226 + $0x58] sm:$0xff] %vm582, %v580
        %595 = vst.msk [vmem:[%s226 + $0x60] sm:$0xff] %vm582, %v581
        %s596 = sand.u32 %s134, 1
        %s597 = sand.u32 %s134, 1
        %s598 = smul.addr %s597, 104
        %s599 = scalar_lea.vmem [#allocation2], %s598
        // Predicated region
        $region41: #{fc_encoder.1} parent=39 // pred_check
          %p600 = pneg %p144
        $region42: #{fc_encoder.1} parent=39 // pred_check_branch
          %602 = sbr.rel (%p600) target = $region44
        $region43: #{fc_encoder.1} parent=39 // pred_region
          %s603 = smul.u32 13, %s16
          %s604 = ssub.s32 25, %s603
          %p605 = scmp.lt.s32.totalorder %s604, 13
          %s606 = scalar_select %p605, %s604, 13
          %s607 = smul.u32 128, %s606
          %p608 = scmp.ne.s32.totalorder 0, %s607
          %s609 = smul.addr %s603, 8
          %s610 = scalar_lea.vmem %s5, %s609
          // Predicated region
          $region45: #{fc_encoder.1} parent=43 // pred_check
            %p611 = pneg %p608
          $region46: #{fc_encoder.1} parent=43 // pred_check_branch
            %613 = sbr.rel (%p611) target = $region48
          $region47: #{fc_encoder.1} parent=43 // pred_region
            // Predicated region
            $region49: #{fc_encoder.1} parent=47 // pred_check
              _
            $region50: #{fc_encoder.1} parent=47 // pred_check_branch
              %615 = sbr.rel (0) target = $region52
            $region51: #{fc_encoder.1} parent=47 // pred_region
              // Predicated region
              $region71: #{fc_encoder.1} parent=51 // pred_check
                _
              $region72: #{fc_encoder.1} parent=51 // pred_check_branch
                %689 = sbr.rel (0) target = $region74
              $region73: #{fc_encoder.1} parent=51 // pred_region
                %s690 = sdiv.u32.pop %s606, 13
                %s691 = srem.u32.pop %s606, 13
                // While loop
                $region75: #{fc_encoder.1} parent=73 // loop_pre_header
                  _
                $region76: #{fc_encoder.1} parent=73 // loop_header
                  %s693 = sphi 0, %s695
                  %p694 = scmp.ge.s32.totalorder %s693, %s690
                  %s698 = sphi 0, %s729
                  %s699 = sphi %s599, %s732
                  %s700 = sphi %s610, %s733
                $region77: #{fc_encoder.1} parent=73 // loop_header_branch
                  %697 = sbr.rel (%p694) target = $region81
                $region78: #{fc_encoder.1} parent=73 // loop_body
                  %v701 = vld [vmem:[%s699] sm:$0xff]
                  %702 = vst [vmem:[%s700] sm:$0xff] %v701
                  %v703 = vld [vmem:[%s699 + $0x8] sm:$0xff]
                  %704 = vst [vmem:[%s700 + $0x8] sm:$0xff] %v703
                  %v705 = vld [vmem:[%s699 + $0x10] sm:$0xff]
                  %706 = vst [vmem:[%s700 + $0x10] sm:$0xff] %v705
                  %v707 = vld [vmem:[%s699 + $0x18] sm:$0xff]
                  %708 = vst [vmem:[%s700 + $0x18] sm:$0xff] %v707
                  %v709 = vld [vmem:[%s699 + $0x20] sm:$0xff]
                  %710 = vst [vmem:[%s700 + $0x20] sm:$0xff] %v709
                  %v711 = vld [vmem:[%s699 + $0x28] sm:$0xff]
                  %712 = vst [vmem:[%s700 + $0x28] sm:$0xff] %v711
                  %v713 = vld [vmem:[%s699 + $0x30] sm:$0xff]
                  %714 = vst [vmem:[%s700 + $0x30] sm:$0xff] %v713
                  %v715 = vld [vmem:[%s699 + $0x38] sm:$0xff]
                  %716 = vst [vmem:[%s700 + $0x38] sm:$0xff] %v715
                  %v717 = vld [vmem:[%s699 + $0x40] sm:$0xff]
                  %718 = vst [vmem:[%s700 + $0x40] sm:$0xff] %v717
                  %v719 = vld [vmem:[%s699 + $0x48] sm:$0xff]
                  %720 = vst [vmem:[%s700 + $0x48] sm:$0xff] %v719
                  %v721 = vld [vmem:[%s699 + $0x50] sm:$0xff]
                  %722 = vst [vmem:[%s700 + $0x50] sm:$0xff] %v721
                  %v723 = vld [vmem:[%s699 + $0x58] sm:$0xff]
                  %724 = vst [vmem:[%s700 + $0x58] sm:$0xff] %v723
                  %v725 = vld [vmem:[%s699 + $0x60] sm:$0xff]
                  %726 = vst [vmem:[%s700 + $0x60] sm:$0xff] %v725
                  %s727 = sadd.s32 1, %s698
                  %p728 = scmp.ge.s32.totalorder %s727, %s690
                  %s729 = scalar_select %p728, 0, %s727
                  %s730 = smul.u32 %s729, 104
                  %s731 = smul.u32 %s729, 104
                  %s732 = scalar_lea.vmem %s599, %s730 [#allocation2]
                  %s733 = scalar_lea.vmem %s610, %s731
                $region79: #{fc_encoder.1} parent=73 // loop_footer
                  %s695 = sadd.s32 %s693, 1
                $region80: #{fc_encoder.1} parent=73 // loop_footer_branch
                  %692 = sbr.rel target = $region76
                $region81: #{fc_encoder.1} parent=73 // loop_exit
                  _
                %s734 = sdiv.u32.pop %s606, 13
                %s735 = srem.u32.pop %s606, 13
                %s736 = smul.u32 %s734, 13
                %s737 = smul.u32 8, %s736
                %s738 = scalar_lea.vmem %s599, %s737 [#allocation2]
                %s739 = smul.u32 8, %s736
                %s740 = scalar_lea.vmem %s610, %s739
                // While loop
                $region82: #{fc_encoder.1} parent=73 // loop_pre_header
                  _
                $region83: #{fc_encoder.1} parent=73 // loop_header
                  %s742 = sphi 0, %s744
                  %p743 = scmp.ge.s32.totalorder %s742, %s735
                  %s747 = sphi 0, %s754
                  %s748 = sphi %s738, %s757
                  %s749 = sphi %s740, %s758
                $region84: #{fc_encoder.1} parent=73 // loop_header_branch
                  %746 = sbr.rel (%p743) target = $region88
                $region85: #{fc_encoder.1} parent=73 // loop_body
                  %v750 = vld [vmem:[%s748] sm:$0xff]
                  %751 = vst [vmem:[%s749] sm:$0xff] %v750
                  %s752 = sadd.s32 1, %s747
                  %p753 = scmp.ge.s32.totalorder %s752, %s735
                  %s754 = scalar_select %p753, 0, %s752
                  %s755 = smul.u32 %s754, 8
                  %s756 = smul.u32 %s754, 8
                  %s757 = scalar_lea.vmem %s738, %s755 [#allocation2]
                  %s758 = scalar_lea.vmem %s740, %s756
                $region86: #{fc_encoder.1} parent=73 // loop_footer
                  %s744 = sadd.s32 %s742, 1
                $region87: #{fc_encoder.1} parent=73 // loop_footer_branch
                  %741 = sbr.rel target = $region83
                $region88: #{fc_encoder.1} parent=73 // loop_exit
                  _
              $region74: #{fc_encoder.1} parent=51 // pred_fallthru
                _
              // Predicated region
              $region89: #{fc_encoder.1} parent=51 // pred_check
                _
              $region90: #{fc_encoder.1} parent=51 // pred_check_branch
                %760 = sbr.rel target = $region92
              $region91: #{fc_encoder.1} parent=51 // pred_region
                _
              $region92: #{fc_encoder.1} parent=51 // pred_fallthru
                _
            $region52: #{fc_encoder.1} parent=47 // pred_fallthru
              _
            // Predicated region
            $region53: #{fc_encoder.1} parent=47 // pred_check
              _
            $region54: #{fc_encoder.1} parent=47 // pred_check_branch
              %617 = sbr.rel target = $region56
            $region55: #{fc_encoder.1} parent=47 // pred_region
              %s619 = sdiv.u32.pop %s606, 13
              %s620 = srem.u32.pop %s606, 13
              // While loop
              $region57: #{fc_encoder.1} parent=55 // loop_pre_header
                _
              $region58: #{fc_encoder.1} parent=55 // loop_header
                %s622 = sphi 0, %s624
                %p623 = scmp.ge.s32.totalorder %s622, %s619
                %s627 = sphi 0, %s658
                %s628 = sphi %s599, %s661
                %s629 = sphi %s610, %s662
              $region59: #{fc_encoder.1} parent=55 // loop_header_branch
                %626 = sbr.rel (%p623) target = $region63
              $region60: #{fc_encoder.1} parent=55 // loop_body
                %v630 = vld [vmem:[%s628] sm:$0xff]
                %631 = vst [vmem:[%s629] sm:$0xff] %v630
                %v632 = vld [vmem:[%s628 + $0x8] sm:$0xff]
                %633 = vst [vmem:[%s629 + $0x8] sm:$0xff] %v632
                %v634 = vld [vmem:[%s628 + $0x10] sm:$0xff]
                %635 = vst [vmem:[%s629 + $0x10] sm:$0xff] %v634
                %v636 = vld [vmem:[%s628 + $0x18] sm:$0xff]
                %637 = vst [vmem:[%s629 + $0x18] sm:$0xff] %v636
                %v638 = vld [vmem:[%s628 + $0x20] sm:$0xff]
                %639 = vst [vmem:[%s629 + $0x20] sm:$0xff] %v638
                %v640 = vld [vmem:[%s628 + $0x28] sm:$0xff]
                %641 = vst [vmem:[%s629 + $0x28] sm:$0xff] %v640
                %v642 = vld [vmem:[%s628 + $0x30] sm:$0xff]
                %643 = vst [vmem:[%s629 + $0x30] sm:$0xff] %v642
                %v644 = vld [vmem:[%s628 + $0x38] sm:$0xff]
                %645 = vst [vmem:[%s629 + $0x38] sm:$0xff] %v644
                %v646 = vld [vmem:[%s628 + $0x40] sm:$0xff]
                %647 = vst [vmem:[%s629 + $0x40] sm:$0xff] %v646
                %v648 = vld [vmem:[%s628 + $0x48] sm:$0xff]
                %649 = vst [vmem:[%s629 + $0x48] sm:$0xff] %v648
                %v650 = vld [vmem:[%s628 + $0x50] sm:$0xff]
                %651 = vst [vmem:[%s629 + $0x50] sm:$0xff] %v650
                %v652 = vld [vmem:[%s628 + $0x58] sm:$0xff]
                %653 = vst [vmem:[%s629 + $0x58] sm:$0xff] %v652
                %v654 = vld [vmem:[%s628 + $0x60] sm:$0xff]
                %655 = vst [vmem:[%s629 + $0x60] sm:$0xff] %v654
                %s656 = sadd.s32 1, %s627
                %p657 = scmp.ge.s32.totalorder %s656, %s619
                %s658 = scalar_select %p657, 0, %s656
                %s659 = smul.u32 %s658, 104
                %s660 = smul.u32 %s658, 104
                %s661 = scalar_lea.vmem %s599, %s659 [#allocation2]
                %s662 = scalar_lea.vmem %s610, %s660
              $region61: #{fc_encoder.1} parent=55 // loop_footer
                %s624 = sadd.s32 %s622, 1
              $region62: #{fc_encoder.1} parent=55 // loop_footer_branch
                %621 = sbr.rel target = $region58
              $region63: #{fc_encoder.1} parent=55 // loop_exit
                _
              %s663 = sdiv.u32.pop %s606, 13
              %s664 = srem.u32.pop %s606, 13
              %s665 = smul.u32 %s663, 13
              %s666 = smul.u32 8, %s665
              %s667 = scalar_lea.vmem %s599, %s666 [#allocation2]
              %s668 = smul.u32 8, %s665
              %s669 = scalar_lea.vmem %s610, %s668
              // While loop
              $region64: #{fc_encoder.1} parent=55 // loop_pre_header
                _
              $region65: #{fc_encoder.1} parent=55 // loop_header
                %s671 = sphi 0, %s673
                %p672 = scmp.ge.s32.totalorder %s671, %s664
                %s676 = sphi 0, %s683
                %s677 = sphi %s667, %s686
                %s678 = sphi %s669, %s687
              $region66: #{fc_encoder.1} parent=55 // loop_header_branch
                %675 = sbr.rel (%p672) target = $region70
              $region67: #{fc_encoder.1} parent=55 // loop_body
                %v679 = vld [vmem:[%s677] sm:$0xff]
                %680 = vst [vmem:[%s678] sm:$0xff] %v679
                %s681 = sadd.s32 1, %s676
                %p682 = scmp.ge.s32.totalorder %s681, %s664
                %s683 = scalar_select %p682, 0, %s681
                %s684 = smul.u32 %s683, 8
                %s685 = smul.u32 %s683, 8
                %s686 = scalar_lea.vmem %s667, %s684 [#allocation2]
                %s687 = scalar_lea.vmem %s669, %s685
              $region68: #{fc_encoder.1} parent=55 // loop_footer
                %s673 = sadd.s32 %s671, 1
              $region69: #{fc_encoder.1} parent=55 // loop_footer_branch
                %670 = sbr.rel target = $region65
              $region70: #{fc_encoder.1} parent=55 // loop_exit
                _
            $region56: #{fc_encoder.1} parent=47 // pred_fallthru
              _
          $region48: #{fc_encoder.1} parent=43 // pred_fallthru
            _
          %761 = vnop
        $region44: #{fc_encoder.1} parent=39 // pred_fallthru
          _
      $region40: #{fc_encoder.1} parent=5 // pred_fallthru
        _
      %p762 = scmp.le.s32.totalorder 2, %s11
      // Predicated region
      $region93: #{fc_encoder.1} parent=5 // pred_check
        %p763 = pneg %p762
      $region94: #{fc_encoder.1} parent=5 // pred_check_branch
        %765 = sbr.rel (%p763) target = $region96
      $region95: #{fc_encoder.1} parent=5 // pred_region
        %s766 = ssub.s32 %s11, 2
        // Predicated region
        $region97: #{fc_encoder.1} parent=95 // pred_check
          %p767 = pneg %p150
        $region98: #{fc_encoder.1} parent=95 // pred_check_branch
          %769 = sbr.rel (%p767) target = $region100
        $region99: #{fc_encoder.1} parent=95 // pred_region
          %s770 = sand.u32 %s135, 1
          %s771 = sand.u32 %s135, 1
          %s772 = smul.addr %s771, 104
          %s773 = scalar_lea.vmem [#allocation2], %s772
        $region100: #{fc_encoder.1} parent=95 // pred_fallthru
          _
      $region96: #{fc_encoder.1} parent=5 // pred_fallthru
        _
    $region6: #{fc_encoder.1} parent=1 // loop_footer
      %s15 = sadd.s32 1, %s11
    $region7: #{fc_encoder.1} parent=1 // loop_footer_branch
      %10 = sbr.rel target = $region3
    $region8: #{fc_encoder.1} parent=1 // loop_exit
      _

</llo_original>
